<compile_context>
chip_gen: v7x
topology: tpu7x:2x2x1
jax: 0.10.0
libtpu: 0.0.40
codegen_flags: <defaults>
</compile_context>

<pallas_src>
import functools

import jax
import jax.numpy as jnp
from jax.experimental import pallas as pl
from jax.experimental.pallas import tpu as pltpu

_NBITS = 23  # uniform bits used for the Bernoulli threshold compare


def _keep_mask(bits, pad_ref, *, block_size, threshold):
    """Recompute the (CG, H, W) keep-mask (1=keep, 0=drop) for one tile.

    bits    : int32 (CG, Hm, Wm) uniform values in [0, 2**_NBITS)
    pad_ref : f32 VMEM scratch (CG, H + 2*pad, W + 2*pad): zero-padded plane.
    """
    cg, hm, wm = bits.shape
    pad = block_size // 2
    hp, wp = pad_ref.shape[1], pad_ref.shape[2]
    h, w = hp - 2 * pad, wp - 2 * pad

    # Bernoulli(gamma) via integer threshold compare (no int->float convert).
    seeds = jnp.where(bits < jnp.int32(threshold),
                      jnp.float32(1.0), jnp.float32(0.0))

    # Zero-padded seed plane; the F.pad(bs//2) and the max_pool padding (bs//2)
    # are folded together into a single offset of 2*pad.
    pad_ref[...] = jnp.zeros_like(pad_ref)
    pad_ref[:, 2 * pad:2 * pad + hm, 2 * pad:2 * pad + wm] = seeds

    # Separable max_pool2d(kernel=bs, stride=1): rows (sublane shifts) first,
    # then columns (lane shifts): 2*(bs-1) maximums instead of bs^2-1.
    rowmax = pad_ref[:, 0:h, :]
    for a in range(1, block_size):
        rowmax = jnp.maximum(rowmax, pad_ref[:, a:a + h, :])
    dil = rowmax[:, :, 0:w]
    for b in range(1, block_size):
        dil = jnp.maximum(dil, rowmax[:, :, b:b + w])
    return jnp.float32(1.0) - dil  # (CG, H, W)


def _mask_sum_kernel(bits_ref, sums_ref, pad_ref, *, block_size, threshold):
    keep = _keep_mask(bits_ref[0], pad_ref,
                      block_size=block_size, threshold=threshold)
    sums_ref[pl.program_id(0), pl.program_id(1)] = jnp.sum(keep)


def _apply_kernel(scale_ref, bits_ref, x_ref, o_ref, pad_ref, *,
                  block_size, threshold):
    keep = _keep_mask(bits_ref[0], pad_ref,
                      block_size=block_size, threshold=threshold)
    scale = scale_ref[0]
    o_ref[...] = (x_ref[...].astype(jnp.float32) * keep * scale).astype(o_ref.dtype)


def _channel_group(C, H, W):
    """Largest divisor of C keeping one f32 x-block around <= 1 MiB,
    so double-buffered in/out blocks stay far under v7x's 64 MiB VMEM."""
    budget = 1 << 20
    for d in range(C, 0, -1):
        if C % d == 0 and d * H * W * 4 <= budget:
            return d
    return 1


def dropblock2d(x, key, *, p, block_size, training=True):
    """DropBlock2d forward. Eval mode returns x unchanged (as in the module)."""
    if not (0.0 <= p <= 1.0):
        raise ValueError(f"drop probability has to be between 0 and 1, but got {p}")
    if not training:
        return x
    if block_size % 2 != 1:
        raise ValueError("DropBlock2d shapes only line up for odd block_size")
    N, C, H, W = x.shape
    if H < block_size or W < block_size:
        raise ValueError("spatial dims must be >= block_size")

    pad = block_size // 2
    Hm, Wm = H - block_size + 1, W - block_size + 1
    gamma = p * H * W / (block_size ** 2 * (Hm * Wm))
    threshold = int(min(max(gamma, 0.0), 1.0) * (1 << _NBITS))

    # Uniform bits drawn once and consumed by both passes, so the mask
    # regenerated in pass 2 is identical to the one summed in pass 1 without
    # ever writing the full mask to HBM.
    raw = jax.random.bits(key, (N, C, Hm, Wm), dtype=jnp.uint32)
    bits = (raw & jnp.uint32((1 << _NBITS) - 1)).astype(jnp.int32)

    CG = _channel_group(C, H, W)
    G = C // CG
    scratch = [pltpu.VMEM((CG, H + 2 * pad, W + 2 * pad), jnp.float32)]
    vmem_limit = 32 * 1024 * 1024  # explicit, with headroom under v7x's 64 MiB

    # ---- pass 1: per-tile keep-mask sums (scalar per tile, SMEM output).
    sums = pl.pallas_call(
        functools.partial(_mask_sum_kernel,
                          block_size=block_size, threshold=threshold),
        out_shape=jax.ShapeDtypeStruct((N, G), jnp.float32),
        grid=(N, G),
        in_specs=[pl.BlockSpec((1, CG, Hm, Wm), lambda n, g: (n, g, 0, 0))],
        out_specs=pl.BlockSpec(memory_space=pltpu.MemorySpace.SMEM),
        scratch_shapes=scratch,
        compiler_params=pltpu.CompilerParams(
            dimension_semantics=("arbitrary", "arbitrary"),
            vmem_limit_bytes=vmem_limit),
    )(bits)

    numel = float(N * C * H * W)
    scale = (numel / (jnp.float32(1e-6) + jnp.sum(sums))).astype(jnp.float32)
    scale = scale.reshape(1)

    # ---- pass 2: regenerate the mask and apply out = x * mask * scale.
    out = pl.pallas_call(
        functools.partial(_apply_kernel,
                          block_size=block_size, threshold=threshold),
        out_shape=jax.ShapeDtypeStruct((N, C, H, W), x.dtype),
        grid=(N, G),
        in_specs=[
            pl.BlockSpec(memory_space=pltpu.MemorySpace.SMEM),          # scale
            pl.BlockSpec((1, CG, Hm, Wm), lambda n, g: (n, g, 0, 0)),   # bits
            pl.BlockSpec((1, CG, H, W), lambda n, g: (n, g, 0, 0)),     # x
        ],
        out_specs=pl.BlockSpec((1, CG, H, W), lambda n, g: (n, g, 0, 0)),
        scratch_shapes=scratch,
        compiler_params=pltpu.CompilerParams(
            dimension_semantics=("parallel", "parallel"),
            vmem_limit_bytes=vmem_limit),
    )(scale, bits, x)
    return out


if __name__ == "__main__":
    key = jax.random.PRNGKey(0)
    kx, knoise = jax.random.split(key)
    x = jax.random.normal(kx, (2, 4, 16, 16), dtype=jnp.float32)

    out = dropblock2d(x, knoise, p=0.2, block_size=3, training=True)
    out = jax.block_until_ready(out)

    assert out.shape == x.shape and out.dtype == x.dtype
    assert bool(jnp.all(jnp.isfinite(out)))
    # kept positions are x scaled by one common factor; dropped positions are 0
    ratio = out / x
    kept = jnp.abs(ratio) > 1e-6
    if bool(jnp.any(kept)):
        vals = jnp.where(kept, ratio, jnp.nan)
        spread = float(jnp.nanmax(vals) - jnp.nanmin(vals))
        assert spread < 1e-3, spread
    # eval mode must be identity
    same = dropblock2d(x, knoise, p=0.2, block_size=3, training=False)
    assert bool(jnp.all(same == x))

    print("KERNEL_OK")
</pallas_src>

<mosaic_0001>
module attributes {stable_mosaic.version = 11 : i64} {
  func.func @_mask_sum_kernel(%arg0: i32, %arg1: i32, %arg2: memref<1x4x14x14xi32, #tpu.memory_space<vmem>>, %arg3: memref<2x1xf32, #tpu.memory_space<smem>>, %arg4: memref<4x18x18xf32, #tpu.memory_space<vmem>>) attributes {dimension_semantics = [#tpu.dimension_semantics<arbitrary>, #tpu.dimension_semantics<arbitrary>], iteration_bounds = array<i64: 2, 1>, scalar_prefetch = 0 : i64, scratch_operands = 1 : i64, tpu.core_type = #tpu.core_type<tc>, window_params = [{transform_indices = @transform_0, window_bounds = array<i64: 1, 4, 14, 14>}, {transform_indices = @transform_1, window_bounds = array<i64: 2, 1>}]} {
    %c0 = arith.constant 0 : index
    %c0_0 = arith.constant 0 : index
    %c0_1 = arith.constant 0 : index
    %c0_2 = arith.constant 0 : index
    %0 = vector.load %arg2[%c0, %c0_0, %c0_1, %c0_2] : memref<1x4x14x14xi32, #tpu.memory_space<vmem>>, vector<1x4x14x14xi32>
    %1 = vector.shape_cast %0 : vector<1x4x14x14xi32> to vector<4x14x14xi32>
    %c243478_i32 = arith.constant 243478 : i32
    %2 = vector.broadcast %c243478_i32 : i32 to vector<4x14x14xi32>
    %3 = arith.cmpi slt, %1, %2 : vector<4x14x14xi32>
    %cst = arith.constant 1.000000e+00 : f32
    %cst_3 = arith.constant 0.000000e+00 : f32
    %4 = vector.broadcast %cst : f32 to vector<4x14x14xf32>
    %5 = vector.broadcast %cst_3 : f32 to vector<4x14x14xf32>
    %6 = arith.select %3, %4, %5 : vector<4x14x14xi1>, vector<4x14x14xf32>
    %cst_4 = arith.constant 0.000000e+00 : f32
    %7 = vector.broadcast %cst_4 : f32 to vector<4x18x18xf32>
    %c0_5 = arith.constant 0 : index
    %c0_6 = arith.constant 0 : index
    %c0_7 = arith.constant 0 : index
    %8 = vector.load %arg4[%c0_5, %c0_6, %c0_7] : memref<4x18x18xf32, #tpu.memory_space<vmem>>, vector<4x18x18xf32>
    tpu.vector_store %arg4[%c0_5, %c0_6, %c0_7], %7 {strides = array<i32>} : memref<4x18x18xf32, #tpu.memory_space<vmem>>, vector<4x18x18xf32>,
    %c0_8 = arith.constant 0 : index
    %c2 = arith.constant 2 : index
    %c2_9 = arith.constant 2 : index
    %9 = vector.load %arg4[%c0_8, %c2, %c2_9] : memref<4x18x18xf32, #tpu.memory_space<vmem>>, vector<4x14x14xf32>
    tpu.vector_store %arg4[%c0_8, %c2, %c2_9], %6 {strides = array<i32>} : memref<4x18x18xf32, #tpu.memory_space<vmem>>, vector<4x14x14xf32>,
    %c0_10 = arith.constant 0 : index
    %c0_11 = arith.constant 0 : index
    %c0_12 = arith.constant 0 : index
    %10 = vector.load %arg4[%c0_10, %c0_11, %c0_12] : memref<4x18x18xf32, #tpu.memory_space<vmem>>, vector<4x16x18xf32>
    %c0_13 = arith.constant 0 : index
    %c1 = arith.constant 1 : index
    %c0_14 = arith.constant 0 : index
    %11 = vector.load %arg4[%c0_13, %c1, %c0_14] : memref<4x18x18xf32, #tpu.memory_space<vmem>>, vector<4x16x18xf32>
    %12 = arith.maximumf %10, %11 : vector<4x16x18xf32>
    %c0_15 = arith.constant 0 : index
    %c2_16 = arith.constant 2 : index
    %c0_17 = arith.constant 0 : index
    %13 = vector.load %arg4[%c0_15, %c2_16, %c0_17] : memref<4x18x18xf32, #tpu.memory_space<vmem>>, vector<4x16x18xf32>
    %14 = arith.maximumf %12, %13 : vector<4x16x18xf32>
    %15 = vector.extract_strided_slice %14 {offsets = [0, 0, 0], sizes = [4, 16, 16], strides = [1, 1, 1]} : vector<4x16x18xf32> to vector<4x16x16xf32>
    %16 = vector.extract_strided_slice %14 {offsets = [0, 0, 1], sizes = [4, 16, 16], strides = [1, 1, 1]} : vector<4x16x18xf32> to vector<4x16x16xf32>
    %17 = arith.maximumf %15, %16 : vector<4x16x16xf32>
    %18 = vector.extract_strided_slice %14 {offsets = [0, 0, 2], sizes = [4, 16, 16], strides = [1, 1, 1]} : vector<4x16x18xf32> to vector<4x16x16xf32>
    %19 = arith.maximumf %17, %18 : vector<4x16x16xf32>
    %cst_18 = arith.constant 1.000000e+00 : f32
    %20 = vector.broadcast %cst_18 : f32 to vector<4x16x16xf32>
    %21 = arith.subf %20, %19 : vector<4x16x16xf32>
    %22 = vector.shape_cast %21 : vector<4x16x16xf32> to vector<1x4x16x16xf32>
    %cst_19 = arith.constant dense<0.000000e+00> : vector<1xf32>
    %23 = vector.multi_reduction <add>, %22, %cst_19 [1, 2, 3] : vector<1x4x16x16xf32> to vector<1xf32>
    %24 = vector.shape_cast %23 : vector<1xf32> to vector<1x1x1x1xf32>
    %25 = vector.extract %24[0, 0, 0, 0] : f32 from vector<1x1x1x1xf32>
    %26 = arith.index_cast %arg0 : i32 to index
    %27 = arith.index_cast %arg1 : i32 to index
    %28 = memref.load %arg3[%26, %27] : memref<2x1xf32, #tpu.memory_space<smem>>
    memref.store %25, %arg3[%26, %27] : memref<2x1xf32, #tpu.memory_space<smem>>
    return
  }
  func.func @transform_0(%arg0: i32, %arg1: i32) -> (i32, i32, i32, i32) {
    %c0_i32 = arith.constant 0 : i32
    %c0_i32_0 = arith.constant 0 : i32
    %c0_i32_1 = arith.constant 0 : i32
    return %arg0, %arg1, %c0_i32, %c0_i32_0 : i32, i32, i32, i32
  }
  func.func @transform_1(%arg0: i32, %arg1: i32) -> (i32, i32) {
    %c0_i32 = arith.constant 0 : i32
    %c0_i32_0 = arith.constant 0 : i32
    %c0_i32_1 = arith.constant 0 : i32
    return %c0_i32, %c0_i32_0 : i32, i32
  }
}

</mosaic_0001>

<llo_original>
// kernel: tpu_custom_call.1
$region0: #{tpu_custom_call.1}
  #allocation0 [shape = 'u32[]', space=smem, size = 0x4, offset = 0x4, fixed_abs, tag = 'smem constant byte address 0x4 - core index']
  #allocation1 [shape = 'u32[144,128]{1,0:T(1,128)}', space=vmem, size = 0x12000, scoped, tag = 'internal scratch']
  #allocation2 [shape = 'f32[4,18,18]{2,1,0:T(8,128)}', space=vmem, size = 0xc000, scoped, tag = 'scratch operand']
  %s0 = inlined_call_operand.vmem [shape: s32[2,4,14,14], index: 0, kind: input, shape index: {}]
  %s1 = inlined_call_operand.vmem [shape: f32[2,1], index: 1, kind: output, shape index: {}]
  %s2 = sld [smem:[#allocation0]]
  $region37: #{tpu_custom_call.1} parent=0
    _
  %s4 = ssub.s32 1, %s2
  %s5 = scalar_select 0, %s4, %s2
  $region1: #{tpu_custom_call.1} parent=0
    #allocation3 [shape = 'u8[1024]{0}', space=smem, size = 0x400, scoped, tag = 'output window, operand 0, single buffered']
    #allocation4 [shape = 's32[2]{0}', space=sflag, size = 0x8, scoped, tag = 'scoped memory for tpu_custom_call.1']
    %6 = vsyncpa [#allocation4], 0
    loop: start=0, step=1, limit=4
    $region2: #{tpu_custom_call.1} parent=1 // loop_pre_header
      _
    $region3: #{tpu_custom_call.1} parent=1 // loop_header
      %s8 = sphi 0, %s12
      %p9 = scmp.ge.s32.totalorder %s8, 4
      %s15 = sphi 0, %s27
      %s16 = sphi 0, %s23
      %s17 = sphi 0, %s15
      %s18 = sphi 0, %s16
      %s19 = sphi 0, %s17
      %s20 = sphi 0, %s18
      %s32 = sphi 0, %s34
      %s35 = sphi 0, %s32
      %s36 = sphi 0, %s35
      %s52 = sphi 0, %s36
      %s56 = sphi 0, %s56
      %s58 = sphi 0, %s56
      %s59 = sphi 0, %s58
      %s73 = sphi 0, %s59
    $region4: #{tpu_custom_call.1} parent=1 // loop_header_branch
      %11 = sbr.rel (%p9) target = $region8
    $region5: #{tpu_custom_call.1} parent=1 // loop_body
      %s13 = ssub.s32 %s8, 1
      %s14 = ssub.s32 %s8, 2
      %s21 = sadd.s32 1, %s16
      %p22 = scmp.ge.s32.totalorder %s21, 1
      %s23 = scalar_select %p22, 0, %s21
      %s24 = sadd.s32 1, %s15
      %s25 = scalar_select %p22, %s24, %s15
      %p26 = scmp.ge.s32.totalorder %s25, 2
      %s27 = scalar_select %p26, 0, %s25
      %s28 = ssub.s32 %s15, %s27
      %s29 = ssub.s32 %s16, %s23
      %s30 = sor.u32 %s28, %s29
      %p31 = scmp.eq.s32.totalorder %s30, 0
      %s33 = sadd.s32 %s32, 1
      %s34 = scalar_select %p31, %s32, %s33
      %p37 = pneg %p31
      %p38 = scmp.eq.s32.totalorder %s8, 1
      %p39 = por %p37, %p38
      %p40 = scmp.ne.s32.totalorder %s32, %s35
      %p41 = scmp.eq.s32.totalorder %s8, 0
      %p42 = por %p40, %p41
      %p43 = scmp.ne.s32.totalorder %s32, %s35
      %p44 = scmp.eq.s32.totalorder %s13, 1
      %p45 = por %p43, %p44
      %p46 = scmp.ne.s32.totalorder %s35, %s36
      %p47 = scmp.eq.s32.totalorder %s13, 0
      %p48 = por %p46, %p47
      %p49 = scmp.ne.s32.totalorder %s35, %s36
      %p50 = scmp.eq.s32.totalorder %s14, 1
      %p51 = por %p49, %p50
      %p53 = scmp.ne.s32.totalorder %s36, %s52
      %p54 = scmp.eq.s32.totalorder %s14, 0
      %p55 = por %p53, %p54
      %s57 = sadd.s32 %s56, 1
      %p60 = scmp.eq.s32.totalorder %s8, 1
      %p61 = scmp.ne.s32.totalorder %s56, %s58
      %p62 = scmp.eq.s32.totalorder %s8, 0
      %p63 = por %p61, %p62
      %p64 = scmp.ne.s32.totalorder %s56, %s58
      %p65 = scmp.eq.s32.totalorder %s13, 1
      %p66 = por %p64, %p65
      %p67 = scmp.ne.s32.totalorder %s58, %s59
      %p68 = scmp.eq.s32.totalorder %s13, 0
      %p69 = por %p67, %p68
      %p70 = scmp.ne.s32.totalorder %s58, %s59
      %p71 = scmp.eq.s32.totalorder %s14, 1
      %p72 = por %p70, %p71
      %p74 = scmp.ne.s32.totalorder %s59, %s73
      %p75 = scmp.eq.s32.totalorder %s14, 0
      %p76 = por %p74, %p75
      %p77 = scmp.le.s32.totalorder 1, %s8
      %p78 = scmp.lt.s32.totalorder %s8, 3
      %p79 = pnand %p77, %p78
      %p80 = pneg %p79
      // Predicated region
      $region9: #{tpu_custom_call.1} parent=5 // pred_check
        _
      $region10: #{tpu_custom_call.1} parent=5 // pred_check_branch
        %82 = sbr.rel (%p79) target = $region12
      $region11: #{tpu_custom_call.1} parent=5 // pred_region
        %s83 = ssub.s32 %s8, 1
      $region12: #{tpu_custom_call.1} parent=5 // pred_fallthru
        _
      %p84 = scmp.lt.s32.totalorder %s8, 2
      // Predicated region
      $region13: #{tpu_custom_call.1} parent=5 // pred_check
        %p85 = pneg %p84
      $region14: #{tpu_custom_call.1} parent=5 // pred_check_branch
        %87 = sbr.rel (%p85) target = $region16
      $region15: #{tpu_custom_call.1} parent=5 // pred_region
        // Predicated region
        $region17: #{tpu_custom_call.1} parent=15 // pred_check
          %p88 = pneg %p42
        $region18: #{tpu_custom_call.1} parent=15 // pred_check_branch
          %90 = sbr.rel (%p88) target = $region20
        $region19: #{tpu_custom_call.1} parent=15 // pred_region
          %s91 = smul.u32 4, %s16
          %p92 = scmp.lt.s32.totalorder %s15, 1
          %s93 = scalar_select %p92, %s15, 1
          %p94 = scmp.lt.s32.totalorder %s91, 3
          %s95 = scalar_select %p94, %s91, 3
          %s96 = smul.addr %s95, 2
          %s97 = smul.addr %s93, 8
          %s98 = sadd.s32 %s96, %s97
          %s99 = smul.addr %s98, 8
          %s100 = scalar_lea.vmem %s0, %s99
          %s101 = smul.u32 4, %s16
        $region20: #{tpu_custom_call.1} parent=15 // pred_fallthru
          _
      $region16: #{tpu_custom_call.1} parent=5 // pred_fallthru
        _
      %p102 = scmp.le.s32.totalorder 1, %s8
      %p103 = scmp.lt.s32.totalorder %s8, 3
      %p104 = pnand %p102, %p103
      %p105 = pneg %p104
      // Predicated region
      $region21: #{tpu_custom_call.1} parent=5 // pred_check
        _
      $region22: #{tpu_custom_call.1} parent=5 // pred_check_branch
        %107 = sbr.rel (%p104) target = $region24
      $region23: #{tpu_custom_call.1} parent=5 // pred_region
        %s108 = ssub.s32 %s8, 1
        %s109 = smul.u32 4, %s18
        %p110 = scmp.lt.s32.totalorder %s17, 1
        %s111 = scalar_select %p110, %s17, 1
        %p112 = scmp.lt.s32.totalorder %s109, 3
        %s113 = scalar_select %p112, %s109, 3
        %s114 = smul.addr %s113, 2
        %s115 = smul.addr %s111, 8
        %s116 = sadd.s32 %s114, %s115
        %s117 = smul.addr %s116, 8
        %s118 = scalar_lea.vmem %s0, %s117
        %p119 = pneg %p48
        %p120 = pneg %p45
        %p121 = pneg %p69
        %p122 = pneg %p66
        %s123 = smul.u32 4, %s18
        %p124 = scmp.lt.s32.totalorder %s17, 1
        %s125 = scalar_select %p124, %s17, 1
        %p126 = scmp.lt.s32.totalorder %s123, 3
        %s127 = scalar_select %p126, %s123, 3
        %s128 = smul.addr %s127, 2
        %s129 = smul.addr %s125, 8
        %s130 = sadd.s32 %s128, %s129
        %s131 = smul.addr %s130, 8
        %s132 = scalar_lea.vmem %s0, %s131
        %s133 = smul.u32 4, %s18
        %v134 = vld [vmem:[%s132] sm:$0xff]
        %v135 = vld [vmem:[%s132 + $0x8] sm:$0x3f]
        %v136 = vld [vmem:[%s132 + $0x10] sm:$0xff]
        %v137 = vld [vmem:[%s132 + $0x18] sm:$0x3f]
        %v138 = vld [vmem:[%s132 + $0x20] sm:$0xff]
        %v139 = vld [vmem:[%s132 + $0x28] sm:$0x3f]
        %v140 = vld [vmem:[%s132 + $0x30] sm:$0xff]
        %v141 = vld [vmem:[%s132 + $0x38] sm:$0x3f]
        %vm142 = vcmp.lt.s32.totalorder %v134, 243478
        %vm143 = vcmp.lt.s32.totalorder %v135, 243478
        %vm144 = vcmp.lt.s32.totalorder %v136, 243478
        %vm145 = vcmp.lt.s32.totalorder %v137, 243478
        %vm146 = vcmp.lt.s32.totalorder %v138, 243478
        %vm147 = vcmp.lt.s32.totalorder %v139, 243478
        %vm148 = vcmp.lt.s32.totalorder %v140, 243478
        %vm149 = vcmp.lt.s32.totalorder %v141, 243478
        %v150 = vsel %vm142, 1.0, 0.0
        %v151 = vsel %vm143, 1.0, 0.0
        %v152 = vsel %vm144, 1.0, 0.0
        %v153 = vsel %vm145, 1.0, 0.0
        %v154 = vsel %vm146, 1.0, 0.0
        %v155 = vsel %vm147, 1.0, 0.0
        %v156 = vsel %vm148, 1.0, 0.0
        %v157 = vsel %vm149, 1.0, 0.0
        %vm158 = vcmask 146432
        %159 = vst.msk [vmem:[#allocation2] sm:$0xff] %vm158, 0.0
        %160 = vst.msk [vmem:[#allocation2 + $0x8] sm:$0xff] %vm158, 0.0
        %vm161 = vcmask 140288
        %162 = vst.msk [vmem:[#allocation2 + $0x10] sm:$0x3] %vm161, 0.0
        %163 = vst.msk [vmem:[#allocation2 + $0x18] sm:$0xff] %vm158, 0.0
        %164 = vst.msk [vmem:[#allocation2 + $0x20] sm:$0xff] %vm158, 0.0
        %165 = vst.msk [vmem:[#allocation2 + $0x28] sm:$0x3] %vm161, 0.0
        %166 = vst.msk [vmem:[#allocation2 + $0x30] sm:$0xff] %vm158, 0.0
        %167 = vst.msk [vmem:[#allocation2 + $0x38] sm:$0xff] %vm158, 0.0
        %168 = vst.msk [vmem:[#allocation2 + $0x40] sm:$0x3] %vm161, 0.0
        %169 = vst.msk [vmem:[#allocation2 + $0x48] sm:$0xff] %vm158, 0.0
        %170 = vst.msk [vmem:[#allocation2 + $0x50] sm:$0xff] %vm158, 0.0
        %171 = vst.msk [vmem:[#allocation2 + $0x58] sm:$0x3] %vm161, 0.0
        %180 = vrot.lane.b32.xlu0 %v150, 2
        %v181 = vpop.permute.xlu0 %180
        %182 = vrot.lane.b32.xlu0 %v151, 2
        %v183 = vpop.permute.xlu0 %182
        %184 = vrot.lane.b32.xlu0 %v152, 2
        %v185 = vpop.permute.xlu0 %184
        %186 = vrot.lane.b32.xlu0 %v153, 2
        %v187 = vpop.permute.xlu0 %186
        %188 = vrot.lane.b32.xlu0 %v154, 2
        %v189 = vpop.permute.xlu0 %188
        %190 = vrot.lane.b32.xlu0 %v155, 2
        %v191 = vpop.permute.xlu0 %190
        %192 = vrot.lane.b32.xlu0 %v156, 2
        %v193 = vpop.permute.xlu0 %192
        %194 = vrot.lane.b32.xlu0 %v157, 2
        %v195 = vpop.permute.xlu0 %194
        %vm204 = vcmask 130064
        %205 = vst.msk [vmem:[#allocation2 + $0x2] sm:$0xff] %vm204, %v181
        %vm206 = vcmask 128016
        %207 = vst.msk [vmem:[#allocation2 + $0xa] sm:$0x3f] %vm206, %v183
        %208 = vst.msk [vmem:[#allocation2 + $0x1a] sm:$0xff] %vm204, %v185
        %209 = vst.msk [vmem:[#allocation2 + $0x22] sm:$0x3f] %vm206, %v187
        %210 = vst.msk [vmem:[#allocation2 + $0x32] sm:$0xff] %vm204, %v189
        %211 = vst.msk [vmem:[#allocation2 + $0x3a] sm:$0x3f] %vm206, %v191
        %212 = vst.msk [vmem:[#allocation2 + $0x4a] sm:$0xff] %vm204, %v193
        %213 = vst.msk [vmem:[#allocation2 + $0x52] sm:$0x3f] %vm206, %v195
        %v214 = vld [vmem:[#allocation2] sm:$0xff]
        %v215 = vld [vmem:[#allocation2 + $0x8] sm:$0xff]
        %v216 = vld [vmem:[#allocation2 + $0x18] sm:$0xff]
        %v217 = vld [vmem:[#allocation2 + $0x20] sm:$0xff]
        %v218 = vld [vmem:[#allocation2 + $0x30] sm:$0xff]
        %v219 = vld [vmem:[#allocation2 + $0x38] sm:$0xff]
        %v220 = vld [vmem:[#allocation2 + $0x48] sm:$0xff]
        %v221 = vld [vmem:[#allocation2 + $0x50] sm:$0xff]
        %v222 = vld [vmem:[#allocation2 + $0x1] sm:$0xff]
        %v223 = vld [vmem:[#allocation2 + $0x9] sm:$0xff]
        %v224 = vld [vmem:[#allocation2 + $0x19] sm:$0xff]
        %v225 = vld [vmem:[#allocation2 + $0x21] sm:$0xff]
        %v226 = vld [vmem:[#allocation2 + $0x31] sm:$0xff]
        %v227 = vld [vmem:[#allocation2 + $0x39] sm:$0xff]
        %v228 = vld [vmem:[#allocation2 + $0x49] sm:$0xff]
        %v229 = vld [vmem:[#allocation2 + $0x51] sm:$0xff]
        %v230 = vmax.f32 %v214, %v222
        %v231 = vmax.f32 %v215, %v223
        %v232 = vmax.f32 %v216, %v224
        %v233 = vmax.f32 %v217, %v225
        %v234 = vmax.f32 %v218, %v226
        %v235 = vmax.f32 %v219, %v227
        %v236 = vmax.f32 %v220, %v228
        %v237 = vmax.f32 %v221, %v229
        %v238 = vld [vmem:[#allocation2 + $0x2] sm:$0xff]
        %v239 = vld [vmem:[#allocation2 + $0xa] sm:$0xff]
        %v240 = vld [vmem:[#allocation2 + $0x1a] sm:$0xff]
        %v241 = vld [vmem:[#allocation2 + $0x22] sm:$0xff]
        %v242 = vld [vmem:[#allocation2 + $0x32] sm:$0xff]
        %v243 = vld [vmem:[#allocation2 + $0x3a] sm:$0xff]
        %v244 = vld [vmem:[#allocation2 + $0x4a] sm:$0xff]
        %v245 = vld [vmem:[#allocation2 + $0x52] sm:$0xff]
        %v246 = vmax.f32 %v230, %v238
        %v247 = vmax.f32 %v231, %v239
        %v248 = vmax.f32 %v232, %v240
        %v249 = vmax.f32 %v233, %v241
        %v250 = vmax.f32 %v234, %v242
        %v251 = vmax.f32 %v235, %v243
        %v252 = vmax.f32 %v236, %v244
        %v253 = vmax.f32 %v237, %v245
        %262 = vrot.lane.b32.xlu0 %v246, 127
        %v263 = vpop.permute.xlu0 %262
        %264 = vrot.lane.b32.xlu0 %v247, 127
        %v265 = vpop.permute.xlu0 %264
        %266 = vrot.lane.b32.xlu0 %v248, 127
        %v267 = vpop.permute.xlu0 %266
        %268 = vrot.lane.b32.xlu0 %v249, 127
        %v269 = vpop.permute.xlu0 %268
        %270 = vrot.lane.b32.xlu0 %v250, 127
        %v271 = vpop.permute.xlu0 %270
        %272 = vrot.lane.b32.xlu0 %v251, 127
        %v273 = vpop.permute.xlu0 %272
        %274 = vrot.lane.b32.xlu0 %v252, 127
        %v275 = vpop.permute.xlu0 %274
        %276 = vrot.lane.b32.xlu0 %v253, 127
        %v277 = vpop.permute.xlu0 %276
        %v286 = vmax.f32 %v246, %v263
        %v287 = vmax.f32 %v247, %v265
        %v288 = vmax.f32 %v248, %v267
        %v289 = vmax.f32 %v249, %v269
        %v290 = vmax.f32 %v250, %v271
        %v291 = vmax.f32 %v251, %v273
        %v292 = vmax.f32 %v252, %v275
        %v293 = vmax.f32 %v253, %v277
        %294 = vrot.lane.b32.xlu0 %v246, 126
        %v295 = vpop.permute.xlu0 %294
        %296 = vrot.lane.b32.xlu0 %v247, 126
        %v297 = vpop.permute.xlu0 %296
        %298 = vrot.lane.b32.xlu0 %v248, 126
        %v299 = vpop.permute.xlu0 %298
        %300 = vrot.lane.b32.xlu0 %v249, 126
        %v301 = vpop.permute.xlu0 %300
        %302 = vrot.lane.b32.xlu0 %v250, 126
        %v303 = vpop.permute.xlu0 %302
        %304 = vrot.lane.b32.xlu0 %v251, 126
        %v305 = vpop.permute.xlu0 %304
        %306 = vrot.lane.b32.xlu0 %v252, 126
        %v307 = vpop.permute.xlu0 %306
        %308 = vrot.lane.b32.xlu0 %v253, 126
        %v309 = vpop.permute.xlu0 %308
        %v318 = vmax.f32 %v286, %v295
        %v319 = vmax.f32 %v287, %v297
        %v320 = vmax.f32 %v288, %v299
        %v321 = vmax.f32 %v289, %v301
        %v322 = vmax.f32 %v290, %v303
        %v323 = vmax.f32 %v291, %v305
        %v324 = vmax.f32 %v292, %v307
        %v325 = vmax.f32 %v293, %v309
        %v326 = vsub.f32 1.0, %v318
        %v327 = vsub.f32 1.0, %v319
        %v328 = vsub.f32 1.0, %v320
        %v329 = vsub.f32 1.0, %v321
        %v330 = vsub.f32 1.0, %v322
        %v331 = vsub.f32 1.0, %v323
        %v332 = vsub.f32 1.0, %v324
        %v333 = vsub.f32 1.0, %v325
        %vm334 = vcmask 130048
        %v335 = vsel %vm334, %v326, 0.0
        %v336 = vsel %vm334, %v327, 0.0
        %v337 = vadd.f32 %v335, %v336
        %v338 = vsel %vm334, %v328, 0.0
        %v339 = vadd.f32 %v337, %v338
        %v340 = vsel %vm334, %v329, 0.0
        %v341 = vadd.f32 %v339, %v340
        %v342 = vsel %vm334, %v330, 0.0
        %v343 = vadd.f32 %v341, %v342
        %v344 = vsel %vm334, %v331, 0.0
        %v345 = vadd.f32 %v343, %v344
        %v346 = vsel %vm334, %v332, 0.0
        %v347 = vadd.f32 %v345, %v346
        %v348 = vsel %vm334, %v333, 0.0
        %v349 = vadd.f32 %v347, %v348
        %350 = vadd.xlane.f32.xlu0 %v349
        %v351 = vpop.xlane.xlu0 %350
        %v352 = vrot.slane %v351, 4
        %v353 = vadd.f32 %v351, %v352
        %v354 = vrot.slane %v353, 2
        %v355 = vadd.f32 %v353, %v354
        %v356 = vrot.slane %v355, 1
        %v357 = vadd.f32 %v355, %v356
        %s358 = vtos %v357
        %s359 = sshra.s32 %s18, 7
        %s360 = sand.u32 %s18, 127
        %s361 = sadd.s32 %s359, %s17
        %s362 = smul.u32 %s361, 128
        %s363 = sshra.s32 %s18, 7
        %s364 = sand.u32 %s18, 127
        %s365 = sadd.s32 %s362, %s364
        %s366 = scalar_lea.smem [#allocation3], %s365
        %367 = sst [smem:[%s366]] %s358
        // Predicated region
        $region25: #{tpu_custom_call.1} parent=23 // pred_check
          %p368 = pneg %p66
        $region26: #{tpu_custom_call.1} parent=23 // pred_check_branch
          %370 = sbr.rel (%p368) target = $region28
        $region27: #{tpu_custom_call.1} parent=23 // pred_region
          %s372 = ssub.s32 32, 32
          %373 = vsyncadd [#allocation4], %s372
          %s375 = sshll.u32 %s1, 4
          %s376 = int_to_ptr.vmem [resolvable:$true] %s375
          %378 = dma.smem_to_vmem [#allocation3], 32, %s376, [#allocation4]
        $region28: #{tpu_custom_call.1} parent=23 // pred_fallthru
          _
        // Predicated region
        $region29: #{tpu_custom_call.1} parent=23 // pred_check
          %p379 = pneg %p66
        $region30: #{tpu_custom_call.1} parent=23 // pred_check_branch
          %381 = sbr.rel (%p379) target = $region32
        $region31: #{tpu_custom_call.1} parent=23 // pred_region
          %382 = dma.done [#allocation4], 32
        $region32: #{tpu_custom_call.1} parent=23 // pred_fallthru
          _
        %383 = sfence
      $region24: #{tpu_custom_call.1} parent=5 // pred_fallthru
        _
      %p384 = scmp.le.s32.totalorder 2, %s8
      // Predicated region
      $region33: #{tpu_custom_call.1} parent=5 // pred_check
        %p385 = pneg %p384
      $region34: #{tpu_custom_call.1} parent=5 // pred_check_branch
        %387 = sbr.rel (%p385) target = $region36
      $region35: #{tpu_custom_call.1} parent=5 // pred_region
        %s388 = ssub.s32 %s8, 2
      $region36: #{tpu_custom_call.1} parent=5 // pred_fallthru
        _
    $region6: #{tpu_custom_call.1} parent=1 // loop_footer
      %s12 = sadd.s32 1, %s8
    $region7: #{tpu_custom_call.1} parent=1 // loop_footer_branch
      %7 = sbr.rel target = $region3
    $region8: #{tpu_custom_call.1} parent=1 // loop_exit
      _
    %389 = vsyncpa [#allocation4], 1
    %s390 = scalar_lea.sflag [#allocation4], 1
    %391 = vsyncpa %s390, 1

</llo_original>
